<compile_context>
chip_gen: v7x
topology: tpu7x:2x2x1
jax: 0.10.0
libtpu: 0.0.40
codegen_flags: <defaults>
</compile_context>

<pallas_src>
import jax
import jax.numpy as jnp
from jax import lax
from jax.experimental import pallas as pl
from jax.experimental.pallas import tpu as pltpu


def _round_up(x, m):
    return ((x + m - 1) // m) * m


# ----------------------------- Pallas kernel ------------------------------ #

def _embed_ln_kernel(tok_ids_ref, pos_ids_ref, typ_ids_ref,
                     tok_emb_ref, pos_emb_ref, typ_emb_ref,
                     gb_ref, out_ref):
    """One (T, D) tile of tokens: gather 3 tables, add, LayerNorm."""
    T = out_ref.shape[0]

    def gather(ids_col_ref, table_ref):
        # ids_col_ref: (T, 1) int32 in VMEM; table_ref: (rows, D) resident.
        rows = table_ref.shape[0]
        ids = ids_col_ref[...]                                  # (T, 1)
        iota = lax.broadcasted_iota(jnp.int32, (T, rows), 1)    # (T, rows)
        onehot = (ids == iota).astype(jnp.float32)              # (T, rows)
        # One-hot matmul gather on the MXU: exact row selection in f32.
        return jnp.dot(onehot, table_ref[...].astype(jnp.float32),
                       preferred_element_type=jnp.float32)      # (T, D)

    x = (gather(tok_ids_ref, tok_emb_ref)
         + gather(pos_ids_ref, pos_emb_ref)
         + gather(typ_ids_ref, typ_emb_ref))                    # (T, D) f32

    # LayerNorm (biased variance, eps=1e-12) -- matches torch nn.LayerNorm.
    mean = jnp.mean(x, axis=-1, keepdims=True)
    xc = x - mean
    var = jnp.mean(xc * xc, axis=-1, keepdims=True)
    inv = lax.rsqrt(var + 1e-12)
    gamma = gb_ref[0:1, :]                                      # (1, D)
    beta = gb_ref[1:2, :]                                       # (1, D)
    out_ref[...] = (xc * inv * gamma + beta).astype(out_ref.dtype)


# ------------------------------- wrapper ----------------------------------- #

def embedding_forward_pallas(input_ids, tok_emb, pos_emb, type_emb,
                             gamma, beta, *,
                             padding_idx=0, pad_position=0, pad_token_type=0,
                             token_type_ids=None, padding_mask=None,
                             block_tokens=256):
    """Pallas port of Embedding.forward (eval mode, dropout == identity)."""
    B, S = input_ids.shape
    V, D = tok_emb.shape
    P = pos_emb.shape[0]
    C = type_emb.shape[0]
    N = B * S

    input_ids = input_ids.astype(jnp.int32)

    # ---- id preprocessing (cheap glue, plain JAX) ----
    if padding_mask is None:
        padding_mask = jnp.where(input_ids == padding_idx, 0, 1)
    position_ids = (jnp.arange(S, dtype=jnp.int32) + 1)[None, :]
    position_ids = jnp.broadcast_to(position_ids, (B, S))
    position_ids = jnp.where(padding_mask == 0, pad_position, position_ids)
    if token_type_ids is None:
        token_type_ids = jnp.ones_like(input_ids)
    token_type_ids = jnp.where(padding_mask == 0, pad_token_type,
                               token_type_ids)

    # Clamp to valid table ranges (OOB ids would otherwise read garbage).
    tok_ids = jnp.clip(input_ids.reshape(N), 0, V - 1).astype(jnp.int32)
    pos_ids = jnp.clip(position_ids.reshape(N), 0, P - 1).astype(jnp.int32)
    typ_ids = jnp.clip(token_type_ids.reshape(N), 0, C - 1).astype(jnp.int32)

    # ---- tiling: T tokens per grid step, T a multiple of 8 ----
    T = min(int(block_tokens), _round_up(N, 8))
    T = _round_up(T, 8)
    N_pad = _round_up(N, T)
    pad = N_pad - N

    def pad_col(ids):
        ids = jnp.pad(ids, (0, pad))            # padded rows use index 0 (valid)
        return ids.reshape(N_pad, 1)

    tok_ids2 = pad_col(tok_ids)
    pos_ids2 = pad_col(pos_ids)
    typ_ids2 = pad_col(typ_ids)

    gb = jnp.stack([gamma.reshape(D), beta.reshape(D)], axis=0)   # (2, D)

    grid = (N_pad // T,)

    out_flat = pl.pallas_call(
        _embed_ln_kernel,
        out_shape=jax.ShapeDtypeStruct((N_pad, D), jnp.float32),
        grid=grid,
        in_specs=[
            # per-tile token / position / type id columns
            pl.BlockSpec((T, 1), lambda i: (i, 0)),
            pl.BlockSpec((T, 1), lambda i: (i, 0)),
            pl.BlockSpec((T, 1), lambda i: (i, 0)),
            # fully VMEM-resident tables (constant index_map -> copied once)
            pl.BlockSpec((V, D), lambda i: (0, 0)),
            pl.BlockSpec((P, D), lambda i: (0, 0)),
            pl.BlockSpec((C, D), lambda i: (0, 0)),
            # LayerNorm gamma/beta stacked as one resident (2, D) block
            pl.BlockSpec((2, D), lambda i: (0, 0)),
        ],
        out_specs=pl.BlockSpec((T, D), lambda i: (i, 0)),
        compiler_params=pltpu.CompilerParams(
            dimension_semantics=("parallel",)),
    )(tok_ids2, pos_ids2, typ_ids2, tok_emb, pos_emb, type_emb, gb)

    return out_flat[:N].reshape(B, S, D)


# ----------------------- deterministic parameter init ---------------------- #

def _xavier_uniform(key, shape):
    fan_in, fan_out = shape[0], shape[1]
    limit = (6.0 / (fan_in + fan_out)) ** 0.5
    return jax.random.uniform(key, shape, jnp.float32, -limit, limit)


def make_params(vocab_size, embedding_dim, max_position_embeddings,
                num_token_types, padding_idx=0):
    k = jax.random.PRNGKey(0)
    k_tok, k_pos, k_typ = jax.random.split(k, 3)
    tok_emb = _xavier_uniform(k_tok, (vocab_size, embedding_dim))
    # Matches the PyTorch module: only tok_emb row `padding_idx` is zeroed
    # (the module's other two zeroing lines also target tok_emb, and all
    # default pad indices are 0).
    tok_emb = tok_emb.at[padding_idx].set(0.0)
    pos_emb = _xavier_uniform(k_pos, (max_position_embeddings, embedding_dim))
    type_emb = _xavier_uniform(k_typ, (num_token_types, embedding_dim))
    gamma = jnp.ones((embedding_dim,), jnp.float32)
    beta = jnp.zeros((embedding_dim,), jnp.float32)
    return tok_emb, pos_emb, type_emb, gamma, beta


# ---------------------------- pure-JAX reference --------------------------- #

def embedding_forward_ref(input_ids, tok_emb, pos_emb, type_emb, gamma, beta,
                          padding_idx=0, pad_position=0, pad_token_type=0):
    B, S = input_ids.shape
    padding_mask = jnp.where(input_ids == padding_idx, 0, 1)
    position_ids = jnp.broadcast_to(
        (jnp.arange(S, dtype=jnp.int32) + 1)[None, :], (B, S))
    position_ids = jnp.where(padding_mask == 0, pad_position, position_ids)
    token_type_ids = jnp.where(padding_mask == 0, pad_token_type,
                               jnp.ones_like(input_ids))
    x = (tok_emb[input_ids] + pos_emb[position_ids] + type_emb[token_type_ids])
    mean = jnp.mean(x, axis=-1, keepdims=True)
    var = jnp.mean((x - mean) ** 2, axis=-1, keepdims=True)
    return (x - mean) * lax.rsqrt(var + 1e-12) * gamma + beta


# ----------------------------------- main ---------------------------------- #

if __name__ == "__main__":
    VOCAB = 50
    D = 128
    MAX_POS = 33          # max_position_embeddings (positions go 1..S)
    N_TYPES = 2
    B, S = 2, 8

    tok_emb, pos_emb, type_emb, gamma, beta = make_params(
        VOCAB, D, MAX_POS, N_TYPES, padding_idx=0)

    key = jax.random.PRNGKey(0)
    input_ids = jax.random.randint(key, (B, S), 0, VOCAB, dtype=jnp.int32)
    # force a couple of padding tokens (id == padding_idx == 0)
    input_ids = input_ids.at[0, -2:].set(0)

    out = embedding_forward_pallas(input_ids, tok_emb, pos_emb, type_emb,
                                   gamma, beta)
    out = jax.block_until_ready(out)

    ref = embedding_forward_ref(input_ids, tok_emb, pos_emb, type_emb,
                                gamma, beta)
    assert out.shape == (B, S, D)
    assert jnp.allclose(out, ref, atol=1e-4, rtol=1e-4), "mismatch vs reference"

    print("KERNEL_OK")
</pallas_src>

<mosaic_0001>
module attributes {stable_mosaic.version = 11 : i64} {
  func.func @_embed_ln_kernel(%arg0: i32, %arg1: memref<16x1xi32, #tpu.memory_space<vmem>>, %arg2: memref<16x1xi32, #tpu.memory_space<vmem>>, %arg3: memref<16x1xi32, #tpu.memory_space<vmem>>, %arg4: memref<50x128xf32, #tpu.memory_space<vmem>>, %arg5: memref<33x128xf32, #tpu.memory_space<vmem>>, %arg6: memref<2x128xf32, #tpu.memory_space<vmem>>, %arg7: memref<2x128xf32, #tpu.memory_space<vmem>>, %arg8: memref<16x128xf32, #tpu.memory_space<vmem>>) attributes {dimension_semantics = [#tpu.dimension_semantics<parallel>], iteration_bounds = array<i64: 1>, scalar_prefetch = 0 : i64, scratch_operands = 0 : i64, tpu.core_type = #tpu.core_type<tc>, window_params = [{transform_indices = @transform_0, window_bounds = array<i64: 16, 1>}, {transform_indices = @transform_1, window_bounds = array<i64: 16, 1>}, {transform_indices = @transform_2, window_bounds = array<i64: 16, 1>}, {pipeline_mode = #tpu.pipeline_mode<synchronous>, transform_indices = @transform_3, window_bounds = array<i64: 50, 128>}, {pipeline_mode = #tpu.pipeline_mode<synchronous>, transform_indices = @transform_4, window_bounds = array<i64: 33, 128>}, {pipeline_mode = #tpu.pipeline_mode<synchronous>, transform_indices = @transform_5, window_bounds = array<i64: 2, 128>}, {pipeline_mode = #tpu.pipeline_mode<synchronous>, transform_indices = @transform_6, window_bounds = array<i64: 2, 128>}, {transform_indices = @transform_7, window_bounds = array<i64: 16, 128>}]} {
    %c0 = arith.constant 0 : index
    %c0_0 = arith.constant 0 : index
    %0 = vector.load %arg1[%c0, %c0_0] : memref<16x1xi32, #tpu.memory_space<vmem>>, vector<16x1xi32>
    %1 = tpu.iota {dimensions = array<i32: 1>} : vector<16x50xi32>
    %2 = vector.broadcast %0 : vector<16x1xi32> to vector<16x50xi32>
    %3 = arith.cmpi eq, %2, %1 : vector<16x50xi32>
    %4 = arith.extui %3 : vector<16x50xi1> to vector<16x50xi32>
    %5 = arith.sitofp %4 : vector<16x50xi32> to vector<16x50xf32>
    %c0_1 = arith.constant 0 : index
    %c0_2 = arith.constant 0 : index
    %6 = vector.load %arg4[%c0_1, %c0_2] : memref<50x128xf32, #tpu.memory_space<vmem>>, vector<50x128xf32>
    %cst = arith.constant dense<0.000000e+00> : vector<16x128xf32>
    %7 = tpu.matmul %5, %6, %cst {dimension_numbers = #tpu.dot_dimension_numbers<[1], [0], [0], [1], [0, 0, 1, 1], [], []>} : vector<16x50xf32>, vector<50x128xf32>, vector<16x128xf32> -> vector<16x128xf32>
    %c0_3 = arith.constant 0 : index
    %c0_4 = arith.constant 0 : index
    %8 = vector.load %arg2[%c0_3, %c0_4] : memref<16x1xi32, #tpu.memory_space<vmem>>, vector<16x1xi32>
    %9 = tpu.iota {dimensions = array<i32: 1>} : vector<16x33xi32>
    %10 = vector.broadcast %8 : vector<16x1xi32> to vector<16x33xi32>
    %11 = arith.cmpi eq, %10, %9 : vector<16x33xi32>
    %12 = arith.extui %11 : vector<16x33xi1> to vector<16x33xi32>
    %13 = arith.sitofp %12 : vector<16x33xi32> to vector<16x33xf32>
    %c0_5 = arith.constant 0 : index
    %c0_6 = arith.constant 0 : index
    %14 = vector.load %arg5[%c0_5, %c0_6] : memref<33x128xf32, #tpu.memory_space<vmem>>, vector<33x128xf32>
    %cst_7 = arith.constant dense<0.000000e+00> : vector<16x128xf32>
    %15 = tpu.matmul %13, %14, %cst_7 {dimension_numbers = #tpu.dot_dimension_numbers<[1], [0], [0], [1], [0, 0, 1, 1], [], []>} : vector<16x33xf32>, vector<33x128xf32>, vector<16x128xf32> -> vector<16x128xf32>
    %16 = arith.addf %7, %15 : vector<16x128xf32>
    %c0_8 = arith.constant 0 : index
    %c0_9 = arith.constant 0 : index
    %17 = vector.load %arg3[%c0_8, %c0_9] : memref<16x1xi32, #tpu.memory_space<vmem>>, vector<16x1xi32>
    %18 = tpu.iota {dimensions = array<i32: 1>} : vector<16x2xi32>
    %19 = vector.broadcast %17 : vector<16x1xi32> to vector<16x2xi32>
    %20 = arith.cmpi eq, %19, %18 : vector<16x2xi32>
    %21 = arith.extui %20 : vector<16x2xi1> to vector<16x2xi32>
    %22 = arith.sitofp %21 : vector<16x2xi32> to vector<16x2xf32>
    %c0_10 = arith.constant 0 : index
    %c0_11 = arith.constant 0 : index
    %23 = vector.load %arg6[%c0_10, %c0_11] : memref<2x128xf32, #tpu.memory_space<vmem>>, vector<2x128xf32>
    %cst_12 = arith.constant dense<0.000000e+00> : vector<16x128xf32>
    %24 = tpu.matmul %22, %23, %cst_12 {dimension_numbers = #tpu.dot_dimension_numbers<[1], [0], [0], [1], [0, 0, 1, 1], [], []>} : vector<16x2xf32>, vector<2x128xf32>, vector<16x128xf32> -> vector<16x128xf32>
    %25 = arith.addf %16, %24 : vector<16x128xf32>
    %cst_13 = arith.constant dense<0.000000e+00> : vector<16xf32>
    %26 = vector.multi_reduction <add>, %25, %cst_13 [1] : vector<16x128xf32> to vector<16xf32>
    %27 = vector.shape_cast %26 : vector<16xf32> to vector<16x1xf32>
    %cst_14 = arith.constant 1.280000e+02 : f32
    %28 = vector.broadcast %cst_14 : f32 to vector<16x1xf32>
    %29 = arith.divf %27, %28 : vector<16x1xf32>
    %30 = vector.broadcast %29 : vector<16x1xf32> to vector<16x128xf32>
    %31 = arith.subf %25, %30 : vector<16x128xf32>
    %32 = arith.mulf %31, %31 : vector<16x128xf32>
    %cst_15 = arith.constant dense<0.000000e+00> : vector<16xf32>
    %33 = vector.multi_reduction <add>, %32, %cst_15 [1] : vector<16x128xf32> to vector<16xf32>
    %34 = vector.shape_cast %33 : vector<16xf32> to vector<16x1xf32>
    %cst_16 = arith.constant 1.280000e+02 : f32
    %35 = vector.broadcast %cst_16 : f32 to vector<16x1xf32>
    %36 = arith.divf %34, %35 : vector<16x1xf32>
    %cst_17 = arith.constant 9.99999996E-13 : f32
    %37 = vector.broadcast %cst_17 : f32 to vector<16x1xf32>
    %38 = arith.addf %36, %37 : vector<16x1xf32>
    %39 = math.rsqrt %38 : vector<16x1xf32>
    %c0_18 = arith.constant 0 : index
    %c0_19 = arith.constant 0 : index
    %40 = vector.load %arg7[%c0_18, %c0_19] : memref<2x128xf32, #tpu.memory_space<vmem>>, vector<1x128xf32>
    %c1 = arith.constant 1 : index
    %c0_20 = arith.constant 0 : index
    %41 = vector.load %arg7[%c1, %c0_20] : memref<2x128xf32, #tpu.memory_space<vmem>>, vector<1x128xf32>
    %42 = vector.broadcast %39 : vector<16x1xf32> to vector<16x128xf32>
    %43 = arith.mulf %31, %42 : vector<16x128xf32>
    %44 = vector.broadcast %40 : vector<1x128xf32> to vector<16x128xf32>
    %45 = arith.mulf %43, %44 : vector<16x128xf32>
    %46 = vector.broadcast %41 : vector<1x128xf32> to vector<16x128xf32>
    %47 = arith.addf %45, %46 : vector<16x128xf32>
    %c0_21 = arith.constant 0 : index
    %c0_22 = arith.constant 0 : index
    %48 = vector.load %arg8[%c0_21, %c0_22] : memref<16x128xf32, #tpu.memory_space<vmem>>, vector<16x128xf32>
    tpu.vector_store %arg8[%c0_21, %c0_22], %47 {strides = array<i32>} : memref<16x128xf32, #tpu.memory_space<vmem>>, vector<16x128xf32>,
    return
  }
  func.func @transform_0(%arg0: i32) -> (i32, i32) {
    %c0_i32 = arith.constant 0 : i32
    %c0_i32_0 = arith.constant 0 : i32
    return %arg0, %c0_i32 : i32, i32
  }
  func.func @transform_1(%arg0: i32) -> (i32, i32) {
    %c0_i32 = arith.constant 0 : i32
    %c0_i32_0 = arith.constant 0 : i32
    return %arg0, %c0_i32 : i32, i32
  }
  func.func @transform_2(%arg0: i32) -> (i32, i32) {
    %c0_i32 = arith.constant 0 : i32
    %c0_i32_0 = arith.constant 0 : i32
    return %arg0, %c0_i32 : i32, i32
  }
  func.func @transform_3(%arg0: i32) -> (i32, i32) {
    %c0_i32 = arith.constant 0 : i32
    %c0_i32_0 = arith.constant 0 : i32
    %c0_i32_1 = arith.constant 0 : i32
    return %c0_i32, %c0_i32_0 : i32, i32
  }
  func.func @transform_4(%arg0: i32) -> (i32, i32) {
    %c0_i32 = arith.constant 0 : i32
    %c0_i32_0 = arith.constant 0 : i32
    %c0_i32_1 = arith.constant 0 : i32
    return %c0_i32, %c0_i32_0 : i32, i32
  }
  func.func @transform_5(%arg0: i32) -> (i32, i32) {
    %c0_i32 = arith.constant 0 : i32
    %c0_i32_0 = arith.constant 0 : i32
    %c0_i32_1 = arith.constant 0 : i32
    return %c0_i32, %c0_i32_0 : i32, i32
  }
  func.func @transform_6(%arg0: i32) -> (i32, i32) {
    %c0_i32 = arith.constant 0 : i32
    %c0_i32_0 = arith.constant 0 : i32
    %c0_i32_1 = arith.constant 0 : i32
    return %c0_i32, %c0_i32_0 : i32, i32
  }
  func.func @transform_7(%arg0: i32) -> (i32, i32) {
    %c0_i32 = arith.constant 0 : i32
    %c0_i32_0 = arith.constant 0 : i32
    return %arg0, %c0_i32 : i32, i32
  }
}

</mosaic_0001>

<llo_original>
// kernel: tpu_custom_call.1
$region0: #{tpu_custom_call.1}
  #allocation0 [shape = 'u32[]', space=smem, size = 0x4, offset = 0x4, fixed_abs, tag = 'smem constant byte address 0x4 - core index']
  #allocation1 [shape = 'u32[144,128]{1,0:T(1,128)}', space=vmem, size = 0x12000, scoped, tag = 'internal scratch']
  %s0 = inlined_call_operand.vmem [shape: s32[16,1], index: 0, kind: input, shape index: {}]
  %s1 = inlined_call_operand.vmem [shape: s32[16,1], index: 1, kind: input, shape index: {}]
  %s2 = inlined_call_operand.vmem [shape: s32[16,1], index: 2, kind: input, shape index: {}]
  %s3 = inlined_call_operand.vmem [shape: f32[50,128], index: 3, kind: input, shape index: {}]
  %s4 = inlined_call_operand.hbm [shape: f32[33,128], index: 4, kind: input, shape index: {}]
  %s5 = inlined_call_operand.vmem [shape: f32[2,128], index: 5, kind: input, shape index: {}]
  %s6 = inlined_call_operand.vmem [shape: f32[2,128], index: 6, kind: input, shape index: {}]
  %s7 = inlined_call_operand.hbm [shape: f32[16,128], index: 7, kind: output, shape index: {}]
  %s8 = sld [smem:[#allocation0]]
  $region42: #{tpu_custom_call.1} parent=0
    _
  %s10 = ssub.s32 1, %s8
  %s11 = scalar_select 0, %s10, %s8
  $region1: #{tpu_custom_call.1} parent=0
    #allocation2 [shape = 'u8[20480]{0}', space=vmem, size = 0x5000, scoped, tag = 'input window, operand 4, single buffered']
    #allocation3 [shape = 's32[1]{0}', space=sflag, size = 0x4, scoped, tag = 'scoped memory for tpu_custom_call.1']
    #allocation4 [shape = 's32[1]{0}', space=sflag, size = 0x4, scoped, tag = 'scoped memory for tpu_custom_call.1']
    #allocation5 [shape = 'u8[8192]{0}', space=vmem, size = 0x2000, scoped, tag = 'output window, operand 0, single buffered']
    %12 = vsyncpa [#allocation3], 0
    %13 = vsyncpa [#allocation4], 0
    // Predicated region
    $region2: #{tpu_custom_call.1} parent=1 // pred_check
      _
    $region3: #{tpu_custom_call.1} parent=1 // pred_check_branch
      %15 = sbr.rel (0) target = $region5
    $region4: #{tpu_custom_call.1} parent=1 // pred_region
      _
    $region5: #{tpu_custom_call.1} parent=1 // pred_fallthru
      _
    // Predicated region
    $region6: #{tpu_custom_call.1} parent=1 // pred_check
      _
    $region7: #{tpu_custom_call.1} parent=1 // pred_check_branch
      %17 = sbr.rel (0) target = $region9
    $region8: #{tpu_custom_call.1} parent=1 // pred_region
      _
    $region9: #{tpu_custom_call.1} parent=1 // pred_fallthru
      _
    // Predicated region
    $region10: #{tpu_custom_call.1} parent=1 // pred_check
      _
    $region11: #{tpu_custom_call.1} parent=1 // pred_check_branch
      %19 = sbr.rel (0) target = $region13
    $region12: #{tpu_custom_call.1} parent=1 // pred_region
      _
    $region13: #{tpu_custom_call.1} parent=1 // pred_fallthru
      _
    // Predicated region
    $region14: #{tpu_custom_call.1} parent=1 // pred_check
      _
    $region15: #{tpu_custom_call.1} parent=1 // pred_check_branch
      %21 = sbr.rel (0) target = $region17
    $region16: #{tpu_custom_call.1} parent=1 // pred_region
      _
    $region17: #{tpu_custom_call.1} parent=1 // pred_fallthru
      _
    // Predicated region
    $region18: #{tpu_custom_call.1} parent=1 // pred_check
      _
    $region19: #{tpu_custom_call.1} parent=1 // pred_check_branch
      %23 = sbr.rel (0) target = $region21
    $region20: #{tpu_custom_call.1} parent=1 // pred_region
      %s25 = ssub.s32 640, 640
      %26 = vsyncadd [#allocation3], %s25
      %s27 = sshll.u32 [#allocation2], 4
      %s28 = int_to_ptr.vmem [resolvable:$true] %s27
      %33 = dma.hbm_to_vmem [thread:$0]  %s4, 640, %s28, [#allocation3], 128, 128, 8
    $region21: #{tpu_custom_call.1} parent=1 // pred_fallthru
      _
    // Predicated region
    $region22: #{tpu_custom_call.1} parent=1 // pred_check
      _
    $region23: #{tpu_custom_call.1} parent=1 // pred_check_branch
      %35 = sbr.rel (0) target = $region25
    $region24: #{tpu_custom_call.1} parent=1 // pred_region
      _
    $region25: #{tpu_custom_call.1} parent=1 // pred_fallthru
      _
    // Predicated region
    $region26: #{tpu_custom_call.1} parent=1 // pred_check
      _
    $region27: #{tpu_custom_call.1} parent=1 // pred_check_branch
      %37 = sbr.rel (0) target = $region29
    $region28: #{tpu_custom_call.1} parent=1 // pred_region
      _
    $region29: #{tpu_custom_call.1} parent=1 // pred_fallthru
      _
    // Predicated region
    $region30: #{tpu_custom_call.1} parent=1 // pred_check
      _
    $region31: #{tpu_custom_call.1} parent=1 // pred_check_branch
      %39 = sbr.rel (0) target = $region33
    $region32: #{tpu_custom_call.1} parent=1 // pred_region
      %40 = dma.done [#allocation3], 640
    $region33: #{tpu_custom_call.1} parent=1 // pred_fallthru
      _
    %v41 = vld [vmem:[%s0] sm:$0xff]
    %v42 = vld [vmem:[%s0 + $0x8] sm:$0xff]
    %v43 = vlaneseq
    %v44 = vand.u32 %v43, 127
    %45 = vset.pattern.permute.xlu0 0
    %46 = vperm.xlu0 %45, %v41
    %v47 = vpop.permute.xlu0 %46
    %48 = vset.pattern.permute.xlu0 0
    %49 = vperm.xlu0 %48, %v42
    %v50 = vpop.permute.xlu0 %49
    %vm51 = vcmp.eq.s32.totalorder %v47, %v44
    %vm52 = vcmp.eq.s32.totalorder %v50, %v44
    %v53 = vsel %vm51, 1, 0
    %v54 = vsel %vm52, 1, 0
    %v55 = vcvt.s32.f32 %v53
    %v56 = vcvt.s32.f32 %v54
    %v57 = vld [vmem:[%s3] sm:$0xff]
    %v58 = vld [vmem:[%s3 + $0x8] sm:$0xff]
    %v59 = vld [vmem:[%s3 + $0x10] sm:$0xff]
    %v60 = vld [vmem:[%s3 + $0x18] sm:$0xff]
    %v61 = vld [vmem:[%s3 + $0x20] sm:$0xff]
    %v62 = vld [vmem:[%s3 + $0x28] sm:$0xff]
    %v63 = vld [vmem:[%s3 + $0x30] sm:$0x3]
    %v64 = vld [vmem:[%s1] sm:$0xff]
    %v65 = vld [vmem:[%s1 + $0x8] sm:$0xff]
    %66 = vset.pattern.permute.xlu0 0
    %67 = vperm.xlu0 %66, %v64
    %v68 = vpop.permute.xlu0 %67
    %69 = vset.pattern.permute.xlu0 0
    %70 = vperm.xlu0 %69, %v65
    %v71 = vpop.permute.xlu0 %70
    %vm72 = vcmp.eq.s32.totalorder %v68, %v44
    %vm73 = vcmp.eq.s32.totalorder %v71, %v44
    %v74 = vsel %vm72, 1, 0
    %v75 = vsel %vm73, 1, 0
    %v76 = vcvt.s32.f32 %v74
    %v77 = vcvt.s32.f32 %v75
    %v78 = vld [vmem:[#allocation2] sm:$0xff]
    %v79 = vld [vmem:[#allocation2 + $0x8] sm:$0xff]
    %v80 = vld [vmem:[#allocation2 + $0x10] sm:$0xff]
    %v81 = vld [vmem:[#allocation2 + $0x18] sm:$0xff]
    %v82 = vld [vmem:[#allocation2 + $0x20] sm:$0x1]
    %vm83 = vcmask 269312
    %v85 = vsel %vm83, %v76, 0
    %v88 = vsel %vm83, %v77, 0
    %vm90 = vcmask 1040384
    %v92 = vsel %vm90, %v82, 0
    %94 = vmatprep.subr.mxu0 0.0
    %95 = vmatpush1.msra.mxu0 %v78
    %96 = vmatprep.subr.mxu0 0.0
    %97 = vmatpush1.msra.mxu0 %v79
    %98 = vmatprep.subr.mxu0 0.0
    %99 = vmatpush1.msra.mxu0 %v80
    %100 = vmatprep.subr.mxu0 0.0
    %101 = vmatpush1.msra.mxu0 %v81
    %102 = vmatprep.subr.mxu0 0.0
    %103 = vmatpush1.msra.mxu0 %v92
    %104 = vmatprep.subr.mxu0 0.0
    %105 = vmatpush1.msra.mxu0 0.0
    %106 = vmatprep.subr.mxu0 0.0
    %107 = vmatpush1.msra.mxu0 0.0
    %108 = vmatprep.subr.mxu0 0.0
    %109 = vmatpush1.msra.mxu0 0.0
    %110 = vmatprep.subr.mxu0 0.0
    %111 = vmatpush1.msra.mxu0 0.0
    %112 = vmatprep.subr.mxu0 0.0
    %113 = vmatpush1.msra.mxu0 0.0
    %114 = vmatprep.subr.mxu0 0.0
    %115 = vmatpush1.msra.mxu0 0.0
    %116 = vmatprep.subr.mxu0 0.0
    %117 = vmatpush1.msra.mxu0 0.0
    %118 = vmatprep.subr.mxu0 0.0
    %119 = vmatpush1.msra.mxu0 0.0
    %120 = vmatprep.subr.mxu0 0.0
    %121 = vmatpush1.msra.mxu0 0.0
    %122 = vmatprep.subr.mxu0 0.0
    %123 = vmatpush1.msra.mxu0 0.0
    %124 = vmatprep.subr.mxu0 0.0
    %125 = vmatpush1.msra.mxu0 0.0
    %126 = vmatprep.subr.mxu0 0.0
    %127 = vmatpush1.msra.mxu0 0.0
    %128 = vmatprep.subr.mxu0 0.0
    %129 = vmatpush1.msra.mxu0 0.0
    %130 = vmatprep.subr.mxu0 0.0
    %131 = vmatpush1.msra.mxu0 0.0
    %132 = vmatprep.subr.mxu0 0.0
    %133 = vmatpush1.msra.mxu0 0.0
    %134 = vmatprep.subr.mxu0 0.0
    %135 = vmatpush1.msra.mxu0 0.0
    %136 = vmatprep.subr.mxu0 0.0
    %137 = vmatpush1.msra.mxu0 0.0
    %138 = vmatprep.subr.mxu0 0.0
    %139 = vmatpush1.msra.mxu0 0.0
    %140 = vmatprep.subr.mxu0 0.0
    %141 = vmatpush1.msra.mxu0 0.0
    %142 = vmatprep.subr.mxu0 0.0
    %143 = vmatpush1.msra.mxu0 0.0
    %144 = vmatprep.subr.mxu0 0.0
    %145 = vmatpush1.msra.mxu0 0.0
    %146 = vmatprep.subr.mxu0 0.0
    %147 = vmatpush1.msra.mxu0 0.0
    %148 = vmatprep.subr.mxu0 0.0
    %149 = vmatpush1.msra.mxu0 0.0
    %150 = vmatprep.subr.mxu0 0.0
    %151 = vmatpush1.msra.mxu0 0.0
    %152 = vmatprep.subr.mxu0 0.0
    %153 = vmatpush1.msra.mxu0 0.0
    %154 = vmatprep.subr.mxu0 0.0
    %155 = vmatpush1.msra.mxu0 0.0
    %156 = vmatprep.subr.mxu0 0.0
    %157 = vmatpush1.msra.mxu0 0.0
    %158 = vmatprep.mubr.f32.mxu0 0.0
    %159 = vmatmul.mubr.f32.gmra.mrb[0].mxu0 %v85
    %v160 = vpop.f32.mrb[0].mxu0
    %v161 = vadd.f32 0.0, %v160
    %v162 = vpop.f32.mrb[0].mxu0
    %163 = vmatprep.mubr.f32.mxu0 0.0
    %164 = vmatmul.mubr.f32.gmra.mrb[0].mxu0 %v88
    %v165 = vpop.f32.mrb[0].mxu0
    %v166 = vadd.f32 0.0, %v165
    %v167 = vpop.f32.mrb[0].mxu0
    %168 = vdwg.mxu0
    %vm169 = vcmask 408576
    %v171 = vsel %vm169, %v55, 0
    %v174 = vsel %vm169, %v56, 0
    %vm176 = vcmask 1041408
    %v178 = vsel %vm176, %v63, 0
    %180 = vmatprep.subr.mxu0 0.0
    %181 = vmatpush1.msra.mxu0 %v57
    %182 = vmatprep.subr.mxu0 0.0
    %183 = vmatpush1.msra.mxu0 %v58
    %184 = vmatprep.subr.mxu0 0.0
    %185 = vmatpush1.msra.mxu0 %v59
    %186 = vmatprep.subr.mxu0 0.0
    %187 = vmatpush1.msra.mxu0 %v60
    %188 = vmatprep.subr.mxu0 0.0
    %189 = vmatpush1.msra.mxu0 %v61
    %190 = vmatprep.subr.mxu0 0.0
    %191 = vmatpush1.msra.mxu0 %v62
    %192 = vmatprep.subr.mxu0 0.0
    %193 = vmatpush1.msra.mxu0 %v178
    %194 = vmatprep.subr.mxu0 0.0
    %195 = vmatpush1.msra.mxu0 0.0
    %196 = vmatprep.subr.mxu0 0.0
    %197 = vmatpush1.msra.mxu0 0.0
    %198 = vmatprep.subr.mxu0 0.0
    %199 = vmatpush1.msra.mxu0 0.0
    %200 = vmatprep.subr.mxu0 0.0
    %201 = vmatpush1.msra.mxu0 0.0
    %202 = vmatprep.subr.mxu0 0.0
    %203 = vmatpush1.msra.mxu0 0.0
    %204 = vmatprep.subr.mxu0 0.0
    %205 = vmatpush1.msra.mxu0 0.0
    %206 = vmatprep.subr.mxu0 0.0
    %207 = vmatpush1.msra.mxu0 0.0
    %208 = vmatprep.subr.mxu0 0.0
    %209 = vmatpush1.msra.mxu0 0.0
    %210 = vmatprep.subr.mxu0 0.0
    %211 = vmatpush1.msra.mxu0 0.0
    %212 = vmatprep.subr.mxu0 0.0
    %213 = vmatpush1.msra.mxu0 0.0
    %214 = vmatprep.subr.mxu0 0.0
    %215 = vmatpush1.msra.mxu0 0.0
    %216 = vmatprep.subr.mxu0 0.0
    %217 = vmatpush1.msra.mxu0 0.0
    %218 = vmatprep.subr.mxu0 0.0
    %219 = vmatpush1.msra.mxu0 0.0
    %220 = vmatprep.subr.mxu0 0.0
    %221 = vmatpush1.msra.mxu0 0.0
    %222 = vmatprep.subr.mxu0 0.0
    %223 = vmatpush1.msra.mxu0 0.0
    %224 = vmatprep.subr.mxu0 0.0
    %225 = vmatpush1.msra.mxu0 0.0
    %226 = vmatprep.subr.mxu0 0.0
    %227 = vmatpush1.msra.mxu0 0.0
    %228 = vmatprep.subr.mxu0 0.0
    %229 = vmatpush1.msra.mxu0 0.0
    %230 = vmatprep.subr.mxu0 0.0
    %231 = vmatpush1.msra.mxu0 0.0
    %232 = vmatprep.subr.mxu0 0.0
    %233 = vmatpush1.msra.mxu0 0.0
    %234 = vmatprep.subr.mxu0 0.0
    %235 = vmatpush1.msra.mxu0 0.0
    %236 = vmatprep.subr.mxu0 0.0
    %237 = vmatpush1.msra.mxu0 0.0
    %238 = vmatprep.subr.mxu0 0.0
    %239 = vmatpush1.msra.mxu0 0.0
    %240 = vmatprep.subr.mxu0 0.0
    %241 = vmatpush1.msra.mxu0 0.0
    %242 = vmatprep.subr.mxu0 0.0
    %243 = vmatpush1.msra.mxu0 0.0
    %244 = vmatprep.mubr.f32.mxu0 0.0
    %245 = vmatmul.mubr.f32.gmra.mrb[0].mxu0 %v171
    %v246 = vpop.f32.mrb[0].mxu0
    %v247 = vadd.f32 %v161, %v246
    %v248 = vpop.f32.mrb[0].mxu0
    %249 = vmatprep.mubr.f32.mxu0 0.0
    %250 = vmatmul.mubr.f32.gmra.mrb[0].mxu0 %v174
    %v251 = vpop.f32.mrb[0].mxu0
    %v252 = vadd.f32 %v166, %v251
    %v253 = vpop.f32.mrb[0].mxu0
    %254 = vdwg.mxu0
    %v255 = vld [vmem:[%s2] sm:$0xff]
    %v256 = vld [vmem:[%s2 + $0x8] sm:$0xff]
    %257 = vset.pattern.permute.xlu0 0
    %258 = vperm.xlu0 %257, %v255
    %v259 = vpop.permute.xlu0 %258
    %260 = vset.pattern.permute.xlu0 0
    %261 = vperm.xlu0 %260, %v256
    %v262 = vpop.permute.xlu0 %261
    %vm263 = vcmp.eq.s32.totalorder %v259, %v44
    %vm264 = vcmp.eq.s32.totalorder %v262, %v44
    %v265 = vsel %vm263, 1, 0
    %v266 = vsel %vm264, 1, 0
    %v267 = vcvt.s32.f32 %v265
    %v268 = vcvt.s32.f32 %v266
    %v269 = vld [vmem:[%s5] sm:$0x3]
    %vm270 = vcmask 15360
    %v272 = vsel %vm270, %v267, 0
    %v275 = vsel %vm270, %v268, 0
    %v278 = vsel %vm176, %v269, 0
    %280 = vmatprep.subr.mxu0 0.0
    %281 = vmatpush1.msra.mxu0 %v278
    %282 = vmatprep.subr.mxu0 0.0
    %283 = vmatpush1.msra.mxu0 0.0
    %284 = vmatprep.subr.mxu0 0.0
    %285 = vmatpush1.msra.mxu0 0.0
    %286 = vmatprep.subr.mxu0 0.0
    %287 = vmatpush1.msra.mxu0 0.0
    %288 = vmatprep.subr.mxu0 0.0
    %289 = vmatpush1.msra.mxu0 0.0
    %290 = vmatprep.subr.mxu0 0.0
    %291 = vmatpush1.msra.mxu0 0.0
    %292 = vmatprep.subr.mxu0 0.0
    %293 = vmatpush1.msra.mxu0 0.0
    %294 = vmatprep.subr.mxu0 0.0
    %295 = vmatpush1.msra.mxu0 0.0
    %296 = vmatprep.subr.mxu0 0.0
    %297 = vmatpush1.msra.mxu0 0.0
    %298 = vmatprep.subr.mxu0 0.0
    %299 = vmatpush1.msra.mxu0 0.0
    %300 = vmatprep.subr.mxu0 0.0
    %301 = vmatpush1.msra.mxu0 0.0
    %302 = vmatprep.subr.mxu0 0.0
    %303 = vmatpush1.msra.mxu0 0.0
    %304 = vmatprep.subr.mxu0 0.0
    %305 = vmatpush1.msra.mxu0 0.0
    %306 = vmatprep.subr.mxu0 0.0
    %307 = vmatpush1.msra.mxu0 0.0
    %308 = vmatprep.subr.mxu0 0.0
    %309 = vmatpush1.msra.mxu0 0.0
    %310 = vmatprep.subr.mxu0 0.0
    %311 = vmatpush1.msra.mxu0 0.0
    %312 = vmatprep.subr.mxu0 0.0
    %313 = vmatpush1.msra.mxu0 0.0
    %314 = vmatprep.subr.mxu0 0.0
    %315 = vmatpush1.msra.mxu0 0.0
    %316 = vmatprep.subr.mxu0 0.0
    %317 = vmatpush1.msra.mxu0 0.0
    %318 = vmatprep.subr.mxu0 0.0
    %319 = vmatpush1.msra.mxu0 0.0
    %320 = vmatprep.subr.mxu0 0.0
    %321 = vmatpush1.msra.mxu0 0.0
    %322 = vmatprep.subr.mxu0 0.0
    %323 = vmatpush1.msra.mxu0 0.0
    %324 = vmatprep.subr.mxu0 0.0
    %325 = vmatpush1.msra.mxu0 0.0
    %326 = vmatprep.subr.mxu0 0.0
    %327 = vmatpush1.msra.mxu0 0.0
    %328 = vmatprep.subr.mxu0 0.0
    %329 = vmatpush1.msra.mxu0 0.0
    %330 = vmatprep.subr.mxu0 0.0
    %331 = vmatpush1.msra.mxu0 0.0
    %332 = vmatprep.subr.mxu0 0.0
    %333 = vmatpush1.msra.mxu0 0.0
    %334 = vmatprep.subr.mxu0 0.0
    %335 = vmatpush1.msra.mxu0 0.0
    %336 = vmatprep.subr.mxu0 0.0
    %337 = vmatpush1.msra.mxu0 0.0
    %338 = vmatprep.subr.mxu0 0.0
    %339 = vmatpush1.msra.mxu0 0.0
    %340 = vmatprep.subr.mxu0 0.0
    %341 = vmatpush1.msra.mxu0 0.0
    %342 = vmatprep.subr.mxu0 0.0
    %343 = vmatpush1.msra.mxu0 0.0
    %344 = vmatprep.mubr.f32.mxu0 0.0
    %345 = vmatmul.mubr.f32.gmra.mrb[0].mxu0 %v272
    %v346 = vpop.f32.mrb[0].mxu0
    %v347 = vadd.f32 0.0, %v346
    %v348 = vpop.f32.mrb[0].mxu0
    %349 = vmatprep.mubr.f32.mxu0 0.0
    %350 = vmatmul.mubr.f32.gmra.mrb[0].mxu0 %v275
    %v351 = vpop.f32.mrb[0].mxu0
    %v352 = vadd.f32 0.0, %v351
    %v353 = vpop.f32.mrb[0].mxu0
    %354 = vdwg.mxu0
    %v355 = vadd.f32 %v247, %v347
    %v356 = vadd.f32 %v252, %v352
    %357 = vadd.xlane.f32.xlu0 %v355
    %v358 = vpop.xlane.xlu0 %357
    %359 = vadd.xlane.f32.xlu0 %v356
    %v360 = vpop.xlane.xlu0 %359
    %v361 = vrcp.pop 128.0
    %v362 = vmul.f32 %v358, %v361
    %v363 = vmul.f32 %v360, %v361
    %v364 = vsub.f32 %v355, %v362
    %v365 = vsub.f32 %v356, %v363
    %v366 = vmul.f32 %v364, %v364
    %v367 = vmul.f32 %v365, %v365
    %368 = vadd.xlane.f32.xlu0 %v366
    %v369 = vpop.xlane.xlu0 %368
    %370 = vadd.xlane.f32.xlu0 %v367
    %v371 = vpop.xlane.xlu0 %370
    %v372 = vmul.f32 %v369, %v361
    %v373 = vmul.f32 %v371, %v361
    %v374 = vadd.f32 %v372, 1e-12
    %v375 = vadd.f32 %v373, 1e-12
    %v376 = vrsqrt.pop %v374
    %v377 = vrsqrt.pop %v375
    %v378 = vld [vmem:[%s6] sm:$0x1]
    %v379 = vld [vmem:[%s6 + $0x1] sm:$0x1]
    %v380 = vmul.f32 %v364, %v376
    %v381 = vmul.f32 %v365, %v377
    %v382 = vlaneseq
    %v383 = vshrl.u32 %v382, 7
    %v384 = vsub.s32 0, %v383
    %v385 = vrot.slane %v378, %v384
    %v386 = vmul.f32 %v380, %v385
    %v387 = vmul.f32 %v381, %v385
    %v388 = vlaneseq
    %v389 = vshrl.u32 %v388, 7
    %v390 = vsub.s32 0, %v389
    %v391 = vrot.slane %v379, %v390
    %v392 = vadd.f32 %v386, %v391
    %v393 = vadd.f32 %v387, %v391
    %394 = vst [vmem:[#allocation5] sm:$0xff] %v392
    %395 = vst [vmem:[#allocation5 + $0x8] sm:$0xff] %v393
    // Predicated region
    $region34: #{tpu_custom_call.1} parent=1 // pred_check
      _
    $region35: #{tpu_custom_call.1} parent=1 // pred_check_branch
      %397 = sbr.rel (0) target = $region37
    $region36: #{tpu_custom_call.1} parent=1 // pred_region
      %s399 = ssub.s32 256, 256
      %400 = vsyncadd [#allocation4], %s399
      %s401 = sshll.u32 [#allocation5], 4
      %s402 = int_to_ptr.vmem [resolvable:$true] %s401
      %407 = dma.vmem_to_hbm [thread:$0]  %s402, 256, %s7, [#allocation4], 128, 128, 8
    $region37: #{tpu_custom_call.1} parent=1 // pred_fallthru
      _
    // Predicated region
    $region38: #{tpu_custom_call.1} parent=1 // pred_check
      _
    $region39: #{tpu_custom_call.1} parent=1 // pred_check_branch
      %409 = sbr.rel (0) target = $region41
    $region40: #{tpu_custom_call.1} parent=1 // pred_region
      %410 = dma.done [#allocation4], 256
    $region41: #{tpu_custom_call.1} parent=1 // pred_fallthru
      _
    %411 = vsyncpa [#allocation3], 1
    %412 = vsyncpa [#allocation4], 1

</llo_original>
